<compile_context>
chip_gen: v7x
topology: tpu7x:2x2x1
jax: 0.10.0
libtpu: 0.0.40
codegen_flags: <defaults>
</compile_context>

<pallas_src>
import functools

import jax
import jax.numpy as jnp
from jax.experimental import pallas as pl
from jax.experimental.pallas import tpu as pltpu

_K = 3                              # thresholds per example (4 ordinal classes)
_OUT_LANES = 128                    # lane-dense width of each per-split partial
_DEFAULT_BLOCK_ELEMS = 512 * 1024   # elements per grid step (~2 MiB f32 logits)
_PAD_LOGIT = 40.0                   # logsigmoid(40) ~ -4e-18; with gate=0 the
                                    # padded elements contribute ~nothing.


def _cdiv(a, b):
    return -(-a // b)


def _round_up(x, m):
    return ((x + m - 1) // m) * m


def _num_partial_splits() -> int:
    """Best-effort TensorCore count (v7x megacore = 2); extra splits are ~free
    on single-core chips (one wasted grid step + one extra finalize at most)."""
    try:
        info = pltpu.get_tpu_info()
        for attr in ("num_cores", "core_count", "num_tensor_cores",
                     "num_tensorcores"):
            v = getattr(info, attr, None)
            if isinstance(v, int) and v > 0:
                return min(v, 2)
    except Exception:
        pass
    return 2


def _coral_kernel(x_ref, g_ref, out_ref, acc_ref, *,
                  tiles_per_split, total_tiles, valid_cols, tile_c):
    c = pl.program_id(0)            # partial-sum split ("parallel" -> v7x TCs)
    i = pl.program_id(1)            # column-tile index within split ("arbitrary")
    t = c * tiles_per_split + i     # global column-tile index
    last = total_tiles - 1          # static

    @pl.when(i == 0)
    def _init():
        acc_ref[...] = jnp.zeros_like(acc_ref)

    def _tile_contrib():
        x = x_ref[...].astype(jnp.float32)      # (R, tile_c), upcast in-kernel
        g = g_ref[...].astype(jnp.float32)      # (R, tile_c), g = 1 - level
        # Numerically stable logsigmoid(x) = min(x, 0) - log1p(exp(-|x|)).
        logpt = jnp.minimum(x, 0.0) - jnp.log1p(jnp.exp(-jnp.abs(x)))
        # logpt*level + (logpt - x)*(1 - level)  ==  logpt - x*(1 - level)
        return logpt - x * g

    needs_mask = (valid_cols % tile_c) != 0     # static: is boundary tile partial?

    if needs_mask:
        @pl.when(t < last)
        def _full_tile():
            acc_ref[...] += _tile_contrib()

        @pl.when(t == last)
        def _boundary_tile():
            per = _tile_contrib()
            rem = valid_cols - last * tile_c    # static, in (0, tile_c]
            col = jax.lax.broadcasted_iota(jnp.int32, per.shape, 1)
            # select (not multiply) so garbage in the partial block is ignored.
            acc_ref[...] += jnp.where(col < rem, per, 0.0)
    else:
        @pl.when(t <= last)
        def _full_tile():
            acc_ref[...] += _tile_contrib()
    # t > last (overhang step of an uneven split): contributes nothing.

    @pl.when(i == pl.num_programs(1) - 1)
    def _finalize():
        # Single cross-lane/sublane reduction per split; one lane-dense write.
        total = jnp.sum(acc_ref[...], keepdims=True)          # (1, 1)
        out_ref[...] = jnp.broadcast_to(total, out_ref.shape)  # (1, 128)


@functools.partial(jax.jit, static_argnames=("block_elems",))
def coral_loss(y_pred, y_true, *, block_elems=_DEFAULT_BLOCK_ELEMS):
    """Pallas CORAL loss.

    y_pred: (N, 3) float32 / bfloat16 logits (streamed at native dtype).
    y_true: (N,) integer labels in [0, 3].
    Returns a float32 scalar equal to the PyTorch module's forward.
    """
    n, k = y_pred.shape
    assert k == _K, f"CORAL expects K={_K} logits per example, got {k}"
    total = _K * n

    # gate[n, k] = 1 - level[n, k] = 1[k >= y_true[n]]  (int8, 3 bytes/example).
    # Building it reads N labels + writes 3N int8 -- tiny next to the logits --
    # and removes both the int32 label stream and the in-kernel level compute.
    thr = jnp.arange(_K, dtype=jnp.int32)[None, :]
    gate = (thr >= y_true.astype(jnp.int32)[:, None]).astype(jnp.int8)   # (N, 3)

    # Lane/sublane-dense repack of the original row-major (N, 3) stream: a
    # row-major reshape to (R, 3N/R) is a free bitcast (no transpose, no extra
    # HBM pass).  Pick the largest sublane-friendly R that divides 3N.
    rows = next((r for r in (32, 16, 8) if total % r == 0), None)
    if rows is not None:
        padded_total = total
        x2 = y_pred.reshape(rows, padded_total // rows)
        g2 = gate.reshape(rows, padded_total // rows)
    else:
        # Fallback (3N % 8 != 0): pad the flat stream by < 8 elements (costs one
        # logits copy).  Padded logits = +_PAD_LOGIT and gate = 0 so the padded
        # elements contribute ~-4e-18 each -- no extra in-kernel masking needed.
        rows = 8
        padded_total = _round_up(total, rows)
        pad = padded_total - total
        x2 = jnp.pad(y_pred.reshape(-1), (0, pad),
                     constant_values=_PAD_LOGIT).reshape(rows, padded_total // rows)
        g2 = jnp.pad(gate.reshape(-1), (0, pad),
                     constant_values=0).reshape(rows, padded_total // rows)

    cols = padded_total // rows

    # Tile the lane axis.  Target >= ~2 MiB of logits per grid step so the
    # ~0.35 us/step pipeline overhead is amortized; use one tile if it all fits.
    max_tile_c = max(128, (block_elems // rows) // 128 * 128)
    tile_c = cols if cols <= max_tile_c else max_tile_c
    total_tiles = _cdiv(cols, tile_c)
    splits = _num_partial_splits() if total_tiles >= 2 else 1
    tiles_per_split = _cdiv(total_tiles, splits)

    kernel = functools.partial(
        _coral_kernel, tiles_per_split=tiles_per_split, total_tiles=total_tiles,
        valid_cols=cols, tile_c=tile_c)

    def _in_map(c, i):
        # Clamp so the (at most one) overhang step of an uneven split never
        # issues an out-of-bounds DMA; the kernel ignores its data anyway.
        return (0, jnp.minimum(c * tiles_per_split + i, total_tiles - 1))

    partials = pl.pallas_call(
        kernel,
        out_shape=jax.ShapeDtypeStruct((1, splits * _OUT_LANES), jnp.float32),
        grid_spec=pltpu.PrefetchScalarGridSpec(
            num_scalar_prefetch=0,
            grid=(splits, tiles_per_split),
            in_specs=[
                pl.BlockSpec((rows, tile_c), _in_map),   # logits, native dtype
                pl.BlockSpec((rows, tile_c), _in_map),   # int8 gate = 1 - level
            ],
            out_specs=pl.BlockSpec((1, _OUT_LANES), lambda c, i: (0, c)),
            # Lane-dense f32 accumulator: per-tile adds are pure VALU; the one
            # cross-lane/sublane reduction happens in the finalize.
            scratch_shapes=[pltpu.VMEM((rows, tile_c), jnp.float32)],
        ),
        compiler_params=pltpu.CompilerParams(
            dimension_semantics=("parallel", "arbitrary"),
            vmem_limit_bytes=32 * 1024 * 1024,
        ),
    )(x2, g2)

    # Combine per-split partial sums; negate and normalize by N exactly once.
    total_sum = jnp.sum(partials[0, ::_OUT_LANES])
    return -total_sum / jnp.float32(n)


def _coral_ref(y_pred, y_true):
    """Pure-JAX reference mirroring the PyTorch forward."""
    levels_tbl = jnp.array(
        [[0, 0, 0], [1, 0, 0], [1, 1, 0], [1, 1, 1]], dtype=jnp.float32)
    levels = levels_tbl[y_true]
    x = y_pred.astype(jnp.float32)
    logpt = jax.nn.log_sigmoid(x)
    loss = jnp.sum(logpt * levels + (logpt - x) * (1.0 - levels), axis=1)
    return -jnp.mean(loss)


if __name__ == "__main__":
    key = jax.random.PRNGKey(0)
    k1, k2, k3, k4, k5, k6 = jax.random.split(key, 6)

    # Case 1: tiny (N, 3) f32 batch, N multiple of 8 (free-bitcast path,
    # single tile, single split).
    n1 = 16
    yp1 = jax.random.normal(k1, (n1, _K), dtype=jnp.float32)
    yt1 = jax.random.randint(k2, (n1,), 0, 4, dtype=jnp.int32)
    out1 = jax.block_until_ready(coral_loss(yp1, yt1))
    ref1 = _coral_ref(yp1, yt1)
    assert jnp.allclose(out1, ref1, rtol=1e-5, atol=1e-5), (out1, ref1)

    # Case 2: bf16 logits with N not a multiple of 8 (pad-fallback path).
    n2 = 301
    yp2 = jax.random.normal(k3, (n2, _K), dtype=jnp.float32).astype(jnp.bfloat16)
    yt2 = jax.random.randint(k4, (n2,), 0, 4, dtype=jnp.int32)
    out2 = jax.block_until_ready(coral_loss(yp2, yt2))
    ref2 = _coral_ref(yp2.astype(jnp.float32), yt2)
    assert jnp.allclose(out2, ref2, rtol=1e-4, atol=1e-4), (out2, ref2)

    # Case 3: small block_elems override to exercise the multi-tile grid, the
    # two-way split, the gated boundary mask and the skipped overhang step,
    # while keeping the test shape small.
    n3 = 4000
    yp3 = jax.random.normal(k5, (n3, _K), dtype=jnp.float32)
    yt3 = jax.random.randint(k6, (n3,), 0, 4, dtype=jnp.int32)
    out3 = jax.block_until_ready(coral_loss(yp3, yt3, block_elems=4096))
    ref3 = _coral_ref(yp3, yt3)
    assert jnp.allclose(out3, ref3, rtol=1e-4, atol=1e-5), (out3, ref3)

    print("KERNEL_OK")
</pallas_src>

<mosaic_0001>
module attributes {stable_mosaic.version = 11 : i64} {
  func.func @_coral_kernel(%arg0: i32, %arg1: i32, %arg2: memref<16x3xf32, #tpu.memory_space<vmem>>, %arg3: memref<16x3xi8, #tpu.memory_space<vmem>>, %arg4: memref<1x128xf32, #tpu.memory_space<vmem>>, %arg5: memref<16x3xf32, #tpu.memory_space<vmem>>) attributes {dimension_semantics = [#tpu.dimension_semantics<parallel>, #tpu.dimension_semantics<arbitrary>], iteration_bounds = array<i64: 1, 1>, scalar_prefetch = 0 : i64, scratch_operands = 1 : i64, tpu.core_type = #tpu.core_type<tc>, window_params = [{transform_indices = @transform_0, window_bounds = array<i64: 16, 3>}, {transform_indices = @transform_1, window_bounds = array<i64: 16, 3>}, {transform_indices = @transform_2, window_bounds = array<i64: 1, 128>}]} {
    %c1_i32 = arith.constant 1 : i32
    %0 = arith.muli %arg0, %c1_i32 : i32
    %1 = arith.addi %0, %arg1 : i32
    %c0_i32 = arith.constant 0 : i32
    %2 = arith.cmpi eq, %arg1, %c0_i32 : i32
    %3 = arith.extui %2 : i1 to i32
    %c0_i32_0 = arith.constant 0 : i32
    %4 = arith.cmpi ne, %3, %c0_i32_0 : i32
    scf.if %4 {
      %cst = arith.constant 0.000000e+00 : f32
      %11 = vector.broadcast %cst : f32 to vector<16x3xf32>
      %c0 = arith.constant 0 : index
      %c0_5 = arith.constant 0 : index
      %12 = vector.load %arg5[%c0, %c0_5] : memref<16x3xf32, #tpu.memory_space<vmem>>, vector<16x3xf32>
      tpu.vector_store %arg5[%c0, %c0_5], %11 {strides = array<i32>} : memref<16x3xf32, #tpu.memory_space<vmem>>, vector<16x3xf32>,
    } else {
    }
    %c0_i32_1 = arith.constant 0 : i32
    %5 = arith.cmpi sle, %1, %c0_i32_1 : i32
    %6 = arith.extui %5 : i1 to i32
    %c0_i32_2 = arith.constant 0 : i32
    %7 = arith.cmpi ne, %6, %c0_i32_2 : i32
    scf.if %7 {
      %c0 = arith.constant 0 : index
      %c0_5 = arith.constant 0 : index
      %11 = vector.load %arg5[%c0, %c0_5] : memref<16x3xf32, #tpu.memory_space<vmem>>, vector<16x3xf32>
      %c0_6 = arith.constant 0 : index
      %c0_7 = arith.constant 0 : index
      %12 = vector.load %arg2[%c0_6, %c0_7] : memref<16x3xf32, #tpu.memory_space<vmem>>, vector<16x3xf32>
      %c0_8 = arith.constant 0 : index
      %c0_9 = arith.constant 0 : index
      %13 = vector.load %arg3[%c0_8, %c0_9] : memref<16x3xi8, #tpu.memory_space<vmem>>, vector<16x3xi8>
      %14 = arith.sitofp %13 : vector<16x3xi8> to vector<16x3xf32>
      %cst = arith.constant 0.000000e+00 : f32
      %15 = vector.broadcast %cst : f32 to vector<16x3xf32>
      %16 = arith.minimumf %12, %15 : vector<16x3xf32>
      %17 = math.absf %12 : vector<16x3xf32>
      %cst_10 = arith.constant 0.000000e+00 : f32
      %18 = vector.broadcast %cst_10 : f32 to vector<16x3xf32>
      %19 = arith.subf %18, %17 : vector<16x3xf32>
      %20 = math.exp %19 : vector<16x3xf32>
      %21 = math.log1p %20 : vector<16x3xf32>
      %22 = arith.subf %16, %21 : vector<16x3xf32>
      %23 = arith.mulf %12, %14 : vector<16x3xf32>
      %24 = arith.subf %22, %23 : vector<16x3xf32>
      %25 = arith.addf %11, %24 : vector<16x3xf32>
      %c0_11 = arith.constant 0 : index
      %c0_12 = arith.constant 0 : index
      %26 = vector.load %arg5[%c0_11, %c0_12] : memref<16x3xf32, #tpu.memory_space<vmem>>, vector<16x3xf32>
      tpu.vector_store %arg5[%c0_11, %c0_12], %25 {strides = array<i32>} : memref<16x3xf32, #tpu.memory_space<vmem>>, vector<16x3xf32>,
    } else {
    }
    %c0_i32_3 = arith.constant 0 : i32
    %8 = arith.cmpi eq, %arg1, %c0_i32_3 : i32
    %9 = arith.extui %8 : i1 to i32
    %c0_i32_4 = arith.constant 0 : i32
    %10 = arith.cmpi ne, %9, %c0_i32_4 : i32
    scf.if %10 {
      %c0 = arith.constant 0 : index
      %c0_5 = arith.constant 0 : index
      %11 = vector.load %arg5[%c0, %c0_5] : memref<16x3xf32, #tpu.memory_space<vmem>>, vector<16x3xf32>
      %12 = vector.shape_cast %11 : vector<16x3xf32> to vector<1x16x3xf32>
      %cst = arith.constant dense<0.000000e+00> : vector<1xf32>
      %13 = vector.multi_reduction <add>, %12, %cst [1, 2] : vector<1x16x3xf32> to vector<1xf32>
      %14 = vector.shape_cast %13 : vector<1xf32> to vector<1x1x1xf32>
      %15 = vector.extract %14[0, 0, 0] : f32 from vector<1x1x1xf32>
      %16 = vector.broadcast %15 : f32 to vector<1x1xf32>
      %17 = vector.shape_cast %16 : vector<1x1xf32> to vector<1x1xf32>
      %18 = vector.broadcast %17 : vector<1x1xf32> to vector<1x128xf32>
      %c0_6 = arith.constant 0 : index
      %c0_7 = arith.constant 0 : index
      %19 = vector.load %arg4[%c0_6, %c0_7] : memref<1x128xf32, #tpu.memory_space<vmem>>, vector<1x128xf32>
      tpu.vector_store %arg4[%c0_6, %c0_7], %18 {strides = array<i32>} : memref<1x128xf32, #tpu.memory_space<vmem>>, vector<1x128xf32>,
    } else {
    }
    return
  }
  func.func @transform_0(%arg0: i32, %arg1: i32) -> (i32, i32) {
    %c1_i32 = arith.constant 1 : i32
    %0 = arith.muli %arg0, %c1_i32 : i32
    %1 = arith.addi %0, %arg1 : i32
    %c0_i32 = arith.constant 0 : i32
    %2 = arith.minsi %1, %c0_i32 : i32
    %c0_i32_0 = arith.constant 0 : i32
    %c0_i32_1 = arith.constant 0 : i32
    return %c0_i32_0, %2 : i32, i32
  }
  func.func @transform_1(%arg0: i32, %arg1: i32) -> (i32, i32) {
    %c1_i32 = arith.constant 1 : i32
    %0 = arith.muli %arg0, %c1_i32 : i32
    %1 = arith.addi %0, %arg1 : i32
    %c0_i32 = arith.constant 0 : i32
    %2 = arith.minsi %1, %c0_i32 : i32
    %c0_i32_0 = arith.constant 0 : i32
    %c0_i32_1 = arith.constant 0 : i32
    return %c0_i32_0, %2 : i32, i32
  }
  func.func @transform_2(%arg0: i32, %arg1: i32) -> (i32, i32) {
    %c0_i32 = arith.constant 0 : i32
    %c0_i32_0 = arith.constant 0 : i32
    return %c0_i32, %arg0 : i32, i32
  }
}

</mosaic_0001>

<llo_original>
// kernel: coral_loss.1
$region0: #{coral_loss.1}
  #allocation0 [shape = 'u32[]', space=smem, size = 0x4, offset = 0x4, fixed_abs, tag = 'smem constant byte address 0x4 - core index']
  #allocation1 [shape = 'u32[144,128]{1,0:T(1,128)}', space=vmem, size = 0x12000, scoped, tag = 'internal scratch']
  #allocation2 [shape = 'f32[16,3]{1,0:T(8,128)}', space=vmem, size = 0x2000, scoped, tag = 'scratch operand']
  %s0 = inlined_call_operand.vmem [shape: f32[16,3], index: 0, kind: input, shape index: {}]
  %s1 = inlined_call_operand.vmem [shape: s8[16,3], index: 1, kind: input, shape index: {}]
  %s2 = inlined_call_operand.vmem [shape: f32[1,128], index: 2, kind: output, shape index: {}]
  %s3 = sld [smem:[#allocation0]]
  $region30: #{coral_loss.1} parent=0
    _
  %s5 = ssub.s32 1, %s3
  %s6 = scalar_select 0, %s5, %s3
  // Predicated region
  $region2: #{coral_loss.1} parent=0 // pred_check
    _
  $region3: #{coral_loss.1} parent=0 // pred_check_branch
    %8 = sbr.rel (0) target = $region5
  $region4: #{coral_loss.1} parent=0 // pred_region
    %s9 = sadd.s32 0, 0
    %p10 = scmp.lt.s32.totalorder %s9, 0
    %s11 = scalar_select %p10, %s9, 0
    %p12 = scmp.lt.s32.totalorder %s11, 0
    %s13 = scalar_select %p12, %s11, 0
    %s14 = smul.addr %s13, 8
    %s15 = scalar_lea.vmem %s0, %s14
    %s16 = sadd.s32 0, 0
    %p17 = scmp.lt.s32.totalorder %s16, 0
    %s18 = scalar_select %p17, %s16, 0
  $region5: #{coral_loss.1} parent=0 // pred_fallthru
    _
  // Predicated region
  $region6: #{coral_loss.1} parent=0 // pred_check
    _
  $region7: #{coral_loss.1} parent=0 // pred_check_branch
    %20 = sbr.rel (0) target = $region9
  $region8: #{coral_loss.1} parent=0 // pred_region
    %s21 = sadd.s32 0, 0
    %p22 = scmp.lt.s32.totalorder %s21, 0
    %s23 = scalar_select %p22, %s21, 0
    %p24 = scmp.lt.s32.totalorder %s23, 0
    %s25 = scalar_select %p24, %s23, 0
    %s26 = smul.addr %s25, 2
    %s27 = scalar_lea.vmem %s1, %s26
    %s28 = sadd.s32 0, 0
    %p29 = scmp.lt.s32.totalorder %s28, 0
    %s30 = scalar_select %p29, %s28, 0
  $region9: #{coral_loss.1} parent=0 // pred_fallthru
    _
  %s31 = sadd.s32 0, 0
  %p32 = scmp.lt.s32.totalorder %s31, 0
  %s33 = scalar_select %p32, %s31, 0
  %p34 = scmp.lt.s32.totalorder %s33, 0
  %s35 = scalar_select %p34, %s33, 0
  %s36 = smul.addr %s35, 8
  %s37 = scalar_lea.vmem %s0, %s36
  %s38 = sadd.s32 0, 0
  %p39 = scmp.lt.s32.totalorder %s38, 0
  %s40 = scalar_select %p39, %s38, 0
  %p41 = scmp.lt.s32.totalorder %s40, 0
  %s42 = scalar_select %p41, %s40, 0
  %s43 = smul.addr %s42, 2
  %s44 = scalar_lea.vmem %s1, %s43
  %s45 = sadd.s32 0, 0
  %p46 = scmp.lt.s32.totalorder %s45, 0
  %s47 = scalar_select %p46, %s45, 0
  %p48 = scmp.lt.s32.totalorder %s47, 0
  %s49 = scalar_select %p48, %s47, 0
  %s50 = smul.addr %s49, 8
  %s51 = scalar_lea.vmem %s0, %s50
  %s52 = sadd.s32 0, 0
  %p53 = scmp.lt.s32.totalorder %s52, 0
  %s54 = scalar_select %p53, %s52, 0
  %s55 = sadd.s32 0, 0
  %p56 = scmp.lt.s32.totalorder %s55, 0
  %s57 = scalar_select %p56, %s55, 0
  %p58 = scmp.lt.s32.totalorder %s57, 0
  %s59 = scalar_select %p58, %s57, 0
  %s60 = smul.addr %s59, 2
  %s61 = scalar_lea.vmem %s1, %s60
  %s62 = sadd.s32 0, 0
  %p63 = scmp.lt.s32.totalorder %s62, 0
  %s64 = scalar_select %p63, %s62, 0
  %s65 = sadd.s32 0, 0
  %p66 = scmp.eq.s32.totalorder 0, 0
  // Predicated region
  $region10: #{coral_loss.1} parent=0 // pred_check
    %p67 = pneg %p66
  $region11: #{coral_loss.1} parent=0 // pred_check_branch
    %69 = sbr.rel (%p67) target = $region13
  $region12: #{coral_loss.1} parent=0 // pred_region
    %vm70 = vcmask 23552
    %71 = vst.msk [vmem:[#allocation2] sm:$0xff] %vm70, 0.0
    %72 = vst.msk [vmem:[#allocation2 + $0x8] sm:$0xff] %vm70, 0.0
  $region13: #{coral_loss.1} parent=0 // pred_fallthru
    _
  %p73 = scmp.le.s32.totalorder %s65, 0
  // Predicated region
  $region14: #{coral_loss.1} parent=0 // pred_check
    %p74 = pneg %p73
  $region15: #{coral_loss.1} parent=0 // pred_check_branch
    %76 = sbr.rel (%p74) target = $region17
  $region16: #{coral_loss.1} parent=0 // pred_region
    %v77 = vld [vmem:[#allocation2] sm:$0xff]
    %v78 = vld [vmem:[#allocation2 + $0x8] sm:$0xff]
    %v79 = vld [vmem:[%s51] sm:$0xff]
    %v80 = vld [vmem:[%s51 + $0x8] sm:$0xff]
    %v81 = vld [vmem:[%s61] sm:$0x3]
    %v82 = vld [vmem:[%s61 + $0x2] sm:$0x3]
    %v83 = vunpack.c.0.s8 %v81
    %v84 = vunpack.c.0.s8 %v82
    %v85 = vcvt.s32.f32 %v83
    %v86 = vcvt.s32.f32 %v84
    %v87 = vmin.f32 %v79, 0.0
    %v88 = vmin.f32 %v80, 0.0
    %v89 = vand.u32 2147483647, %v79
    %v90 = vand.u32 2147483647, %v80
    %v91 = vsub.f32 0.0, %v89
    %v92 = vsub.f32 0.0, %v90
    %v93 = vmul.f32 %v91, 1.442695
    %v94 = vpow.pop %v93
    %v95 = vmul.f32 %v92, 1.442695
    %v96 = vpow.pop %v95
    %v97 = vadd.f32 %v94, 1.0
    %v98 = vlog2.pop %v97
    %v99 = vmul.f32 %v98, 0.6931472
    %v100 = vmul.f32 -0.5, %v94
    %v101 = vadd.f32 %v100, 1.0
    %v102 = vmul.f32 %v101, %v94
    %v103 = vand.u32 2147483647, %v94
    %vm104 = vcmp.lt.f32.partialorder %v103, 0.0004427343
    %v105 = vsel %vm104, %v102, %v99
    %v106 = vadd.f32 %v96, 1.0
    %v107 = vlog2.pop %v106
    %v108 = vmul.f32 %v107, 0.6931472
    %v109 = vmul.f32 -0.5, %v96
    %v110 = vadd.f32 %v109, 1.0
    %v111 = vmul.f32 %v110, %v96
    %v112 = vand.u32 2147483647, %v96
    %vm113 = vcmp.lt.f32.partialorder %v112, 0.0004427343
    %v114 = vsel %vm113, %v111, %v108
    %v115 = vsub.f32 %v87, %v105
    %v116 = vsub.f32 %v88, %v114
    %v117 = vmul.f32 %v79, %v85
    %v118 = vmul.f32 %v80, %v86
    %v119 = vsub.f32 %v115, %v117
    %v120 = vsub.f32 %v116, %v118
    %v121 = vadd.f32 %v77, %v119
    %v122 = vadd.f32 %v78, %v120
    %vm123 = vcmask 23552
    %124 = vst.msk [vmem:[#allocation2] sm:$0xff] %vm123, %v121
    %125 = vst.msk [vmem:[#allocation2 + $0x8] sm:$0xff] %vm123, %v122
  $region17: #{coral_loss.1} parent=0 // pred_fallthru
    _
  // Predicated region
  $region18: #{coral_loss.1} parent=0 // pred_check
    %p126 = pneg %p66
  $region19: #{coral_loss.1} parent=0 // pred_check_branch
    %128 = sbr.rel (%p126) target = $region21
  $region20: #{coral_loss.1} parent=0 // pred_region
    %v129 = vld [vmem:[#allocation2] sm:$0xff]
    %v130 = vld [vmem:[#allocation2 + $0x8] sm:$0xff]
    %vm131 = vcmask 23552
    %v132 = vsel %vm131, %v129, 0.0
    %v133 = vsel %vm131, %v130, 0.0
    %v134 = vadd.f32 %v132, %v133
    %135 = vadd.xlane.f32.xlu0 %v134
    %v136 = vpop.xlane.xlu0 %135
    %v137 = vrot.slane %v136, 4
    %v138 = vadd.f32 %v136, %v137
    %v139 = vrot.slane %v138, 2
    %v140 = vadd.f32 %v138, %v139
    %v141 = vrot.slane %v140, 1
    %v142 = vadd.f32 %v140, %v141
    %s143 = vtos %v142
    %v144 = vstv %s143
    %145 = vst [vmem:[%s2] sm:$0x1] %v144
  $region21: #{coral_loss.1} parent=0 // pred_fallthru
    _
  // Predicated region
  $region22: #{coral_loss.1} parent=0 // pred_check
    _
  $region23: #{coral_loss.1} parent=0 // pred_check_branch
    %147 = sbr.rel (0) target = $region25
  $region24: #{coral_loss.1} parent=0 // pred_region
    _
  $region25: #{coral_loss.1} parent=0 // pred_fallthru
    _
  // Predicated region
  $region26: #{coral_loss.1} parent=0 // pred_check
    _
  $region27: #{coral_loss.1} parent=0 // pred_check_branch
    %149 = sbr.rel (0) target = $region29
  $region28: #{coral_loss.1} parent=0 // pred_region
    _
  $region29: #{coral_loss.1} parent=0 // pred_fallthru
    _

</llo_original>
